<compile_context>
chip_gen: v6e
topology: v6e:2x2x1
jax: 0.10.0
libtpu: 0.0.40
codegen_flags: <defaults>
</compile_context>

<pallas_src>
import jax
import jax.numpy as jnp
import numpy as np
from jax.experimental import pallas as pl
from jax.experimental.pallas import tpu as pltpu

EPS = 1e-5


def _round_up(v, mult):
    return ((v + mult - 1) // mult) * mult


def _vmem_capacity_bytes():
    """Physical per-core VMEM; conservative (v7x = 64 MiB) fallback if the
    query is unavailable."""
    try:
        return int(pltpu.get_tpu_info().vmem_capacity_bytes)
    except Exception:
        return 64 << 20


def _vmem_budget_bytes():
    cap = _vmem_capacity_bytes()
    # ~24 MiB budget on v7x (64 MiB physical), ~48 MiB on v5e/v6e (128 MiB).
    return int(min(max(cap // 2 - (8 << 20), 8 << 20), 48 << 20))


def _per_row_bytes(s, n, m, out_pad, itemsize=4):
    """Lane-padded VMEM bytes per batch row of a grid step."""
    n_lanes = _round_up(n, 128)
    p_lanes = _round_up(2 * m, 128)
    return (2 * s * n_lanes        # x tile (double-buffered input block)
            + 2 * out_pad          # fused output slab (double-buffered)
            + s * p_lanes          # fused projection (query|keys), f32
            + s * n_lanes          # sim[:, :, None] * x temporary
            + 2 * n_lanes          # out row / misc
            ) * itemsize


def _fixed_bytes(n, m, itemsize=4):
    # resident fused (n, 2m) weight, lane-padded, double-buffered
    return 2 * _round_up(n, 8) * _round_up(2 * m, 128) * itemsize


def _footprint_bytes(tb, s, n, m, out_pad):
    return _fixed_bytes(n, m) + tb * _per_row_bytes(s, n, m, out_pad)


def _pick_tile_b(b, s, n, m, out_pad):
    """Largest batch tile that (a) divides b, (b) fits the per-generation VMEM
    budget using lane-padded accounting, and (c) keeps enough grid steps for
    pipelining overlap / v7x dual-TensorCore sharding."""
    budget = _vmem_budget_bytes()
    per_row = _per_row_bytes(s, n, m, out_pad)
    tb_mem = max(1, (budget - _fixed_bytes(n, m)) // per_row)

    if b >= 64:
        min_steps = 8
    elif b >= 32:
        min_steps = 4
    else:
        min_steps = 1
    tb_steps = max(1, b // min_steps)

    cap_tb = max(1, min(tb_mem, tb_steps, b))
    for tb in range((cap_tb // 8) * 8, 0, -8):
        if b % tb == 0:
            return tb
    # Tiny / awkward batches: one tile covering the whole batch (a block dim
    # equal to the full array dim is always legal).
    return b


def _make_kernel(tb, s, n, m, out_pad, norm, approx):
    def kernel(x_ref, w_ref, o_ref):
        x = x_ref[...]                                   # (TB, S, N)  f32
        W = w_ref[...]                                   # (N, 2M): [:, :m]=A^T, [:, m:]=B^T

        # ---- one fused MXU matmul for both projections over the whole tile --
        proj = jnp.dot(x.reshape(tb * s, n), W,
                       preferred_element_type=jnp.float32)          # (TB*S, 2M)
        proj = proj.reshape(tb, s, 2 * m)

        # query: per-row A-projection summed over seq (same op order as torch)
        query = jnp.sum(proj[:, :, :m], axis=1)                     # (TB, M)
        keys = proj[:, :, m:]                                       # (TB, S, M)

        if norm:
            q_den = EPS + jnp.sqrt(jnp.sum(query * query, axis=-1, keepdims=True))
            k_den = EPS + jnp.sqrt(jnp.sum(keys * keys, axis=-1, keepdims=True))
            if approx:
                # EUP slot is otherwise idle; takes divides off the VPU path.
                query = query * pl.reciprocal(q_den, approx=True)
                keys = keys * pl.reciprocal(k_den, approx=True)
            else:
                query = query / q_den
                keys = keys / k_den

        # sim[b, s] = <query[b, :], keys[b, s, :]>
        sim = jnp.sum(query[:, None, :] * keys, axis=-1)            # (TB, S)
        # out[b, :] = sum_s sim[b, s] * x[b, s, :]
        out = jnp.sum(sim[:, :, None] * x, axis=1)                  # (TB, N)

        # ---- single fused, lane-dense (unmasked) store ----------------------
        parts = [out, sim]
        tail = out_pad - (n + s)
        if tail:
            parts.append(jnp.zeros((tb, tail), out.dtype))
        o_ref[...] = jnp.concatenate(parts, axis=-1).astype(o_ref.dtype)

    return kernel


def simple_attention(x, A, Bp, *, norm=True, approx_reciprocal=False, tile_b=None):
    """x: (b, s, n) f32; A, Bp: (m, n) f32 -> (out (b, n), sim (b, s))."""
    b, s, n = x.shape
    m, n2 = A.shape
    assert n2 == n and Bp.shape == (m, n)

    out_pad = _round_up(n + s, 128)

    if tile_b is None:
        tb = _pick_tile_b(b, s, n, m, out_pad)
    else:
        tb = tile_b
        assert b % tb == 0, "tile_b must divide batch"
        assert tb % 8 == 0 or tb == b, \
            "tile_b must be a multiple of 8 or equal to the full batch"

    # Fused resident weight: [:, :m] = A^T (query proj), [:, m:] = B^T (keys).
    W = jnp.concatenate([jnp.asarray(A).T, jnp.asarray(Bp).T], axis=-1)   # (n, 2m)

    cap = _vmem_capacity_bytes()
    footprint = _footprint_bytes(tb, s, n, m, out_pad)
    vmem_limit = int(min(cap - (8 << 20), max(footprint + (4 << 20), 32 << 20)))

    slab = pl.pallas_call(
        _make_kernel(tb, s, n, m, out_pad, norm, approx_reciprocal),
        out_shape=jax.ShapeDtypeStruct((b, out_pad), x.dtype),
        grid=(b // tb,),
        in_specs=[
            pl.BlockSpec((tb, s, n), lambda i: (i, 0, 0)),    # pipelined x tiles
            pl.BlockSpec((n, 2 * m), lambda i: (0, 0)),       # resident fused weights
        ],
        out_specs=pl.BlockSpec((tb, out_pad), lambda i: (i, 0)),
        compiler_params=pltpu.CompilerParams(
            dimension_semantics=("parallel",),                # v7x: 2 TCs share batch
            vmem_limit_bytes=vmem_limit),
    )(x, W)

    return slab[:, :n], slab[:, n:n + s]


def _reference(x, A, Bp, norm=True):
    """Pure-JAX reference mirroring the torch forward exactly."""
    query = jnp.einsum('ij,bmj->bmi', A, x).sum(axis=1)        # (b, m)
    keys = jnp.einsum('ij,bmj->bmi', Bp, x)                    # (b, s, m)
    if norm:
        query = query / (EPS + jnp.linalg.norm(query, axis=1, keepdims=True))
        keys = keys / (EPS + jnp.linalg.norm(keys, axis=2, keepdims=True))
    sim = jnp.einsum('bi,bji->bj', query, keys)                # (b, s)
    out = jnp.einsum('bk,bkn->bn', sim, x)                     # (b, n)
    return out, sim


if __name__ == "__main__":
    # Small shapes consistent with the module: SimpleAttention(n=32, m=16, norm=True)
    batch, seq, n_feat, m_attn = 2, 8, 32, 16
    norm = True

    key = jax.random.PRNGKey(0)
    kx, ka, kb = jax.random.split(key, 3)
    # torch.rand -> uniform [0, 1)
    x = jax.random.uniform(kx, (batch, seq, n_feat), dtype=jnp.float32)
    A = jax.random.uniform(ka, (m_attn, n_feat), dtype=jnp.float32)
    Bp = jax.random.uniform(kb, (m_attn, n_feat), dtype=jnp.float32)

    out_ref_v, sim_ref_v = _reference(x, A, Bp, norm=norm)

    # Exact-norm path (parity default): must match torch semantics to 1e-5.
    out, sim = simple_attention(x, A, Bp, norm=norm, approx_reciprocal=False)
    jax.block_until_ready((out, sim))
    np.testing.assert_allclose(np.asarray(out), np.asarray(out_ref_v),
                               rtol=1e-5, atol=1e-5)
    np.testing.assert_allclose(np.asarray(sim), np.asarray(sim_ref_v),
                               rtol=1e-5, atol=1e-5)

    # Fast path: EUP approximate reciprocal for the norm (looser tolerance).
    out_a, sim_a = simple_attention(x, A, Bp, norm=norm, approx_reciprocal=True)
    jax.block_until_ready((out_a, sim_a))
    np.testing.assert_allclose(np.asarray(out_a), np.asarray(out_ref_v),
                               rtol=1e-2, atol=1e-2)
    np.testing.assert_allclose(np.asarray(sim_a), np.asarray(sim_ref_v),
                               rtol=1e-2, atol=1e-2)

    print("KERNEL_OK")
</pallas_src>

<mosaic_0001>
module attributes {stable_mosaic.version = 11 : i64} {
  func.func @kernel(%arg0: i32, %arg1: memref<2x8x32xf32, #tpu.memory_space<vmem>>, %arg2: memref<32x32xf32, #tpu.memory_space<vmem>>, %arg3: memref<2x128xf32, #tpu.memory_space<vmem>>) attributes {dimension_semantics = [#tpu.dimension_semantics<parallel>], iteration_bounds = array<i64: 1>, scalar_prefetch = 0 : i64, scratch_operands = 0 : i64, tpu.core_type = #tpu.core_type<tc>, window_params = [{transform_indices = @transform_0, window_bounds = array<i64: 2, 8, 32>}, {pipeline_mode = #tpu.pipeline_mode<synchronous>, transform_indices = @transform_1, window_bounds = array<i64: 32, 32>}, {transform_indices = @transform_2, window_bounds = array<i64: 2, 128>}]} {
    %c0 = arith.constant 0 : index
    %c0_0 = arith.constant 0 : index
    %c0_1 = arith.constant 0 : index
    %0 = vector.load %arg1[%c0, %c0_0, %c0_1] : memref<2x8x32xf32, #tpu.memory_space<vmem>>, vector<2x8x32xf32>
    %c0_2 = arith.constant 0 : index
    %c0_3 = arith.constant 0 : index
    %1 = vector.load %arg2[%c0_2, %c0_3] : memref<32x32xf32, #tpu.memory_space<vmem>>, vector<32x32xf32>
    %2 = vector.shape_cast %0 : vector<2x8x32xf32> to vector<16x32xf32>
    %cst = arith.constant dense<0.000000e+00> : vector<16x32xf32>
    %3 = tpu.matmul %2, %1, %cst {dimension_numbers = #tpu.dot_dimension_numbers<[1], [0], [0], [1], [0, 0, 1, 1], [], []>} : vector<16x32xf32>, vector<32x32xf32>, vector<16x32xf32> -> vector<16x32xf32>
    %4 = vector.shape_cast %3 : vector<16x32xf32> to vector<2x8x32xf32>
    %5 = vector.extract_strided_slice %4 {offsets = [0, 0, 0], sizes = [2, 8, 16], strides = [1, 1, 1]} : vector<2x8x32xf32> to vector<2x8x16xf32>
    %cst_4 = arith.constant dense<0.000000e+00> : vector<2x16xf32>
    %6 = vector.multi_reduction <add>, %5, %cst_4 [1] : vector<2x8x16xf32> to vector<2x16xf32>
    %7 = vector.extract_strided_slice %4 {offsets = [0, 0, 16], sizes = [2, 8, 16], strides = [1, 1, 1]} : vector<2x8x32xf32> to vector<2x8x16xf32>
    %8 = arith.mulf %6, %6 : vector<2x16xf32>
    %cst_5 = arith.constant dense<0.000000e+00> : vector<2xf32>
    %9 = vector.multi_reduction <add>, %8, %cst_5 [1] : vector<2x16xf32> to vector<2xf32>
    %10 = vector.shape_cast %9 : vector<2xf32> to vector<2x1xf32>
    %11 = math.sqrt %10 : vector<2x1xf32>
    %cst_6 = arith.constant 9.99999974E-6 : f32
    %12 = vector.broadcast %cst_6 : f32 to vector<2x1xf32>
    %13 = arith.addf %12, %11 : vector<2x1xf32>
    %14 = arith.mulf %7, %7 : vector<2x8x16xf32>
    %cst_7 = arith.constant dense<0.000000e+00> : vector<2x8xf32>
    %15 = vector.multi_reduction <add>, %14, %cst_7 [2] : vector<2x8x16xf32> to vector<2x8xf32>
    %16 = vector.shape_cast %15 : vector<2x8xf32> to vector<2x8x1xf32>
    %17 = math.sqrt %16 : vector<2x8x1xf32>
    %cst_8 = arith.constant 9.99999974E-6 : f32
    %18 = vector.broadcast %cst_8 : f32 to vector<2x8x1xf32>
    %19 = arith.addf %18, %17 : vector<2x8x1xf32>
    %20 = vector.broadcast %13 : vector<2x1xf32> to vector<2x16xf32>
    %21 = arith.divf %6, %20 : vector<2x16xf32>
    %22 = vector.broadcast %19 : vector<2x8x1xf32> to vector<2x8x16xf32>
    %23 = arith.divf %7, %22 : vector<2x8x16xf32>
    %24 = vector.shape_cast %21 : vector<2x16xf32> to vector<2x1x16xf32>
    %25 = vector.broadcast %24 : vector<2x1x16xf32> to vector<2x8x16xf32>
    %26 = arith.mulf %25, %23 : vector<2x8x16xf32>
    %cst_9 = arith.constant dense<0.000000e+00> : vector<2x8xf32>
    %27 = vector.multi_reduction <add>, %26, %cst_9 [2] : vector<2x8x16xf32> to vector<2x8xf32>
    %28 = vector.shape_cast %27 : vector<2x8xf32> to vector<2x8x1xf32>
    %29 = vector.broadcast %28 : vector<2x8x1xf32> to vector<2x8x32xf32>
    %30 = arith.mulf %29, %0 : vector<2x8x32xf32>
    %cst_10 = arith.constant dense<0.000000e+00> : vector<2x32xf32>
    %31 = vector.multi_reduction <add>, %30, %cst_10 [1] : vector<2x8x32xf32> to vector<2x32xf32>
    %cst_11 = arith.constant 0.000000e+00 : f32
    %32 = vector.broadcast %cst_11 : f32 to vector<2x88xf32>
    %33 = tpu.concatenate %31, %27, %32 in 1 : vector<2x32xf32>, vector<2x8xf32>, vector<2x88xf32> -> vector<2x128xf32>
    %c0_12 = arith.constant 0 : index
    %c0_13 = arith.constant 0 : index
    %34 = vector.load %arg3[%c0_12, %c0_13] : memref<2x128xf32, #tpu.memory_space<vmem>>, vector<2x128xf32>
    tpu.vector_store %arg3[%c0_12, %c0_13], %33 {strides = array<i32>} : memref<2x128xf32, #tpu.memory_space<vmem>>, vector<2x128xf32>,
    return
  }
  func.func @transform_0(%arg0: i32) -> (i32, i32, i32) {
    %c0_i32 = arith.constant 0 : i32
    %c0_i32_0 = arith.constant 0 : i32
    %c0_i32_1 = arith.constant 0 : i32
    return %arg0, %c0_i32, %c0_i32_0 : i32, i32, i32
  }
  func.func @transform_1(%arg0: i32) -> (i32, i32) {
    %c0_i32 = arith.constant 0 : i32
    %c0_i32_0 = arith.constant 0 : i32
    %c0_i32_1 = arith.constant 0 : i32
    return %c0_i32, %c0_i32_0 : i32, i32
  }
  func.func @transform_2(%arg0: i32) -> (i32, i32) {
    %c0_i32 = arith.constant 0 : i32
    %c0_i32_0 = arith.constant 0 : i32
    return %arg0, %c0_i32 : i32, i32
  }
}

</mosaic_0001>

<llo_original>
// kernel: tpu_custom_call.1
$region0: #{tpu_custom_call.1}
  #allocation0 [shape = 'u32[]', space=smem, size = 0x4, offset = 0x4, fixed_abs, tag = 'smem constant byte address 0x4 - core index']
  #allocation1 [shape = 'u32[144,128]{1,0:T(1,128)}', space=vmem, size = 0x12000, scoped, tag = 'internal scratch']
  %s0 = inlined_call_operand.hbm [shape: f32[2,8,32], index: 0, kind: input, shape index: {}]
  %s1 = inlined_call_operand.hbm [shape: f32[32,32], index: 1, kind: input, shape index: {}]
  %s2 = inlined_call_operand.hbm [shape: f32[2,128], index: 2, kind: output, shape index: {}]
  %s3 = sld [smem:[#allocation0]]
  $region26: #{tpu_custom_call.1} parent=0
    _
  %s5 = ssub.s32 1, %s3
  %s6 = scalar_select 0, %s5, %s3
  $region1: #{tpu_custom_call.1} parent=0
    #allocation2 [shape = 'u8[8192]{0}', space=vmem, size = 0x2000, scoped, tag = 'input window, operand 0, single buffered']
    #allocation3 [shape = 's32[1]{0}', space=sflag, size = 0x4, scoped, tag = 'scoped memory for tpu_custom_call.1']
    #allocation4 [shape = 's32[1]{0}', space=sflag, size = 0x4, scoped, tag = 'scoped memory for tpu_custom_call.1']
    #allocation5 [shape = 'u8[16384]{0}', space=vmem, size = 0x4000, scoped, tag = 'input window, operand 1, single buffered']
    #allocation6 [shape = 's32[1]{0}', space=sflag, size = 0x4, scoped, tag = 'scoped memory for tpu_custom_call.1']
    #allocation7 [shape = 'u8[1024]{0}', space=vmem, size = 0x400, scoped, tag = 'output window, operand 0, single buffered']
    %7 = vsyncpa [#allocation3], 0
    %8 = vsyncpa [#allocation6], 0
    %9 = vsyncpa [#allocation4], 0
    // Predicated region
    $region2: #{tpu_custom_call.1} parent=1 // pred_check
      _
    $region3: #{tpu_custom_call.1} parent=1 // pred_check_branch
      %11 = sbr.rel (0) target = $region5
    $region4: #{tpu_custom_call.1} parent=1 // pred_region
      %s13 = ssub.s32 256, 256
      %14 = vsyncadd [#allocation3], %s13
      %s15 = sshll.u32 [#allocation2], 4
      %s16 = int_to_ptr.vmem [resolvable:$true] %s15
      %21 = dma.hbm_to_vmem [thread:$0]  %s0, 256, %s16, [#allocation3], 128, 128, 8
    $region5: #{tpu_custom_call.1} parent=1 // pred_fallthru
      _
    // Predicated region
    $region6: #{tpu_custom_call.1} parent=1 // pred_check
      _
    $region7: #{tpu_custom_call.1} parent=1 // pred_check_branch
      %23 = sbr.rel (0) target = $region9
    $region8: #{tpu_custom_call.1} parent=1 // pred_region
      %s25 = ssub.s32 512, 512
      %26 = vsyncadd [#allocation6], %s25
      %s27 = sshll.u32 [#allocation5], 4
      %s28 = int_to_ptr.vmem [resolvable:$true] %s27
      %33 = dma.hbm_to_vmem [thread:$0]  %s1, 512, %s28, [#allocation6], 128, 128, 8
    $region9: #{tpu_custom_call.1} parent=1 // pred_fallthru
      _
    // Predicated region
    $region10: #{tpu_custom_call.1} parent=1 // pred_check
      _
    $region11: #{tpu_custom_call.1} parent=1 // pred_check_branch
      %35 = sbr.rel (0) target = $region13
    $region12: #{tpu_custom_call.1} parent=1 // pred_region
      %36 = dma.done [#allocation3], 256
    $region13: #{tpu_custom_call.1} parent=1 // pred_fallthru
      _
    // Predicated region
    $region14: #{tpu_custom_call.1} parent=1 // pred_check
      _
    $region15: #{tpu_custom_call.1} parent=1 // pred_check_branch
      %38 = sbr.rel (0) target = $region17
    $region16: #{tpu_custom_call.1} parent=1 // pred_region
      %39 = dma.done [#allocation6], 512
    $region17: #{tpu_custom_call.1} parent=1 // pred_fallthru
      _
    %v40 = vld [vmem:[#allocation2] sm:$0xff]
    %v41 = vld [vmem:[#allocation2 + $0x8] sm:$0xff]
    %v42 = vld [vmem:[#allocation5] sm:$0xff]
    %v43 = vld [vmem:[#allocation5 + $0x8] sm:$0xff]
    %v44 = vld [vmem:[#allocation5 + $0x10] sm:$0xff]
    %v45 = vld [vmem:[#allocation5 + $0x18] sm:$0xff]
    %vm46 = vcmask 261120
    %v48 = vsel %vm46, %v40, 0
    %v51 = vsel %vm46, %v41, 0
    %53 = vmatprep.subr.mxu0 0.0
    %54 = vmatpush1.msra.mxu0 0.0
    %55 = vmatprep.subr.mxu0 0.0
    %56 = vmatpush1.msra.mxu0 0.0
    %57 = vmatprep.subr.mxu0 0.0
    %58 = vmatpush1.msra.mxu0 0.0
    %59 = vmatprep.subr.mxu0 0.0
    %60 = vmatpush1.msra.mxu0 0.0
    %61 = vmatprep.subr.mxu0 0.0
    %62 = vmatpush1.msra.mxu0 0.0
    %63 = vmatprep.subr.mxu0 0.0
    %64 = vmatpush1.msra.mxu0 0.0
    %65 = vmatprep.subr.mxu0 0.0
    %66 = vmatpush1.msra.mxu0 0.0
    %67 = vmatprep.subr.mxu0 0.0
    %68 = vmatpush1.msra.mxu0 0.0
    %69 = vmatprep.subr.mxu0 0.0
    %70 = vmatpush1.msra.mxu0 0.0
    %71 = vmatprep.subr.mxu0 0.0
    %72 = vmatpush1.msra.mxu0 0.0
    %73 = vmatprep.subr.mxu0 0.0
    %74 = vmatpush1.msra.mxu0 0.0
    %75 = vmatprep.subr.mxu0 0.0
    %76 = vmatpush1.msra.mxu0 0.0
    %77 = vmatprep.subr.mxu0 0.0
    %78 = vmatpush1.msra.mxu0 %v45
    %79 = vmatprep.subr.mxu0 0.0
    %80 = vmatpush1.msra.mxu0 %v44
    %81 = vmatprep.subr.mxu0 0.0
    %82 = vmatpush1.msra.mxu0 %v43
    %83 = vmatprep.subr.mxu0 0.0
    %84 = vmatpush1.msra.mxu0 %v42
    %85 = vmatprep.subr.mxu0 0.0
    %86 = vmatpush2.msra.mxu0 0.0
    %87 = vmatprep.subr.mxu0 0.0
    %88 = vmatpush2.msra.mxu0 0.0
    %89 = vmatprep.subr.mxu0 0.0
    %90 = vmatpush2.msra.mxu0 0.0
    %91 = vmatprep.subr.mxu0 0.0
    %92 = vmatpush2.msra.mxu0 0.0
    %93 = vmatprep.subr.mxu0 0.0
    %94 = vmatpush2.msra.mxu0 0.0
    %95 = vmatprep.subr.mxu0 0.0
    %96 = vmatpush2.msra.mxu0 0.0
    %97 = vmatprep.subr.mxu0 0.0
    %98 = vmatpush2.msra.mxu0 0.0
    %99 = vmatprep.subr.mxu0 0.0
    %100 = vmatpush2.msra.mxu0 0.0
    %101 = vmatprep.subr.mxu0 0.0
    %102 = vmatpush2.msra.mxu0 0.0
    %103 = vmatprep.subr.mxu0 0.0
    %104 = vmatpush2.msra.mxu0 0.0
    %105 = vmatprep.subr.mxu0 0.0
    %106 = vmatpush2.msra.mxu0 0.0
    %107 = vmatprep.subr.mxu0 0.0
    %108 = vmatpush2.msra.mxu0 0.0
    %109 = vmatprep.subr.mxu0 0.0
    %110 = vmatpush2.msra.mxu0 0.0
    %111 = vmatprep.subr.mxu0 0.0
    %112 = vmatpush2.msra.mxu0 0.0
    %113 = vmatprep.subr.mxu0 0.0
    %114 = vmatpush2.msra.mxu0 0.0
    %115 = vmatprep.subr.mxu0 0.0
    %116 = vmatpush2.msra.mxu0 0.0
    %117 = vmatprep.mubr.f32.mxu0 0.0
    %118 = vmatmul.mubr.f32.gmra.mxu0 %v48
    %v119 = vpop.f32.mrf.mxu0
    %v120 = vadd.f32 0.0, %v119
    %v121 = vpop.f32.mrf.mxu0
    %122 = vmatprep.mubr.f32.mxu0 0.0
    %123 = vmatmul.mubr.f32.gmra.mxu0 %v51
    %v124 = vpop.f32.mrf.mxu0
    %v125 = vadd.f32 0.0, %v124
    %v126 = vpop.f32.mrf.mxu0
    %127 = vdwg.mxu0
    %vm128 = vcmask 130048
    %v129 = vsel %vm128, %v120, 0.0
    %v130 = vrot.slane %v129, 4
    %v131 = vadd.f32 %v129, %v130
    %v132 = vrot.slane %v131, 2
    %v133 = vadd.f32 %v131, %v132
    %v134 = vrot.slane %v133, 1
    %v135 = vadd.f32 %v133, %v134
    %v136 = vsel %vm128, %v125, 0.0
    %v137 = vrot.slane %v136, 4
    %v138 = vadd.f32 %v136, %v137
    %v139 = vrot.slane %v138, 2
    %v140 = vadd.f32 %v138, %v139
    %v141 = vrot.slane %v140, 1
    %v142 = vadd.f32 %v140, %v141
    %v143 = vmul.f32 %v135, %v135
    %v144 = vmul.f32 %v142, %v142
    %vm147 = vcmask 1041409
    %v148 = vsel %vm147, %v144, %v143
    %vm150 = vcmask 123904
    %v151 = vsel %vm150, %v148, 0.0
    %152 = vadd.xlane.f32.xlu0 %v151
    %v153 = vpop.xlane.xlu0 %152
    %v154 = vrsqrt.pop %v153
    %v155 = vmul.f32 %v153, %v154
    %vm156 = vcmp.eq.f32.partialorder %v153, inf
    %v157 = vsel %vm156, %v153, %v155
    %vm158 = vcmp.eq.f32.partialorder %v153, 0.0
    %v159 = vand.u32 %v153, 2147483648
    %v160 = vsel %vm158, %v159, %v157
    %v161 = vadd.f32 %v160, 1e-05
    %v162 = vmul.f32 %v120, %v120
    %v163 = vmul.f32 %v125, %v125
    %166 = vrot.lane.b32.xlu0 %v162, 112
    %v167 = vpop.permute.xlu0 %166
    %168 = vrot.lane.b32.xlu0 %v163, 112
    %v169 = vpop.permute.xlu0 %168
    %v172 = vsel %vm128, %v167, 0.0
    %173 = vadd.xlane.f32.xlu0 %v172
    %v174 = vpop.xlane.xlu0 %173
    %v175 = vsel %vm128, %v169, 0.0
    %176 = vadd.xlane.f32.xlu0 %v175
    %v177 = vpop.xlane.xlu0 %176
    %v178 = vrsqrt.pop %v174
    %v179 = vmul.f32 %v174, %v178
    %vm180 = vcmp.eq.f32.partialorder %v174, inf
    %v181 = vsel %vm180, %v174, %v179
    %vm182 = vcmp.eq.f32.partialorder %v174, 0.0
    %v183 = vand.u32 %v174, 2147483648
    %v184 = vsel %vm182, %v183, %v181
    %v185 = vrsqrt.pop %v177
    %v186 = vmul.f32 %v177, %v185
    %vm187 = vcmp.eq.f32.partialorder %v177, inf
    %v188 = vsel %vm187, %v177, %v186
    %vm189 = vcmp.eq.f32.partialorder %v177, 0.0
    %v190 = vand.u32 %v177, 2147483648
    %v191 = vsel %vm189, %v190, %v188
    %v192 = vadd.f32 %v184, 1e-05
    %v193 = vadd.f32 %v191, 1e-05
    %v195 = vrot.slane %v161, 1
    %v198 = vrcp.pop %v161
    %v199 = vmul.f32 %v135, %v198
    %v200 = vrcp.pop %v195
    %v201 = vmul.f32 %v142, %v200
    %v202 = vrcp.pop %v192
    %v203 = vmul.f32 %v120, %v202
    %v204 = vrcp.pop %v193
    %v205 = vmul.f32 %v125, %v204
    %v206 = vlaneseq
    %v207 = vshrl.u32 %v206, 7
    %v208 = vsub.s32 0, %v207
    %v209 = vrot.slane %v199, %v208
    %v210 = vlaneseq
    %v211 = vshrl.u32 %v210, 7
    %v212 = vsub.s32 0, %v211
    %v213 = vrot.slane %v201, %v212
    %216 = vrot.lane.b32.xlu0 %v203, 112
    %v217 = vpop.permute.xlu0 %216
    %218 = vrot.lane.b32.xlu0 %v205, 112
    %v219 = vpop.permute.xlu0 %218
    %v222 = vmul.f32 %v209, %v217
    %v223 = vmul.f32 %v213, %v219
    %v224 = vsel %vm128, %v222, 0.0
    %225 = vadd.xlane.f32.xlu0 %v224
    %v226 = vpop.xlane.xlu0 %225
    %v227 = vsel %vm128, %v223, 0.0
    %228 = vadd.xlane.f32.xlu0 %v227
    %v229 = vpop.xlane.xlu0 %228
    %v230 = vmul.f32 %v226, %v40
    %v231 = vmul.f32 %v229, %v41
    %v232 = vsel %vm46, %v230, 0.0
    %v233 = vrot.slane %v232, 4
    %v234 = vadd.f32 %v232, %v233
    %v235 = vrot.slane %v234, 2
    %v236 = vadd.f32 %v234, %v235
    %v237 = vrot.slane %v236, 1
    %v238 = vadd.f32 %v236, %v237
    %v239 = vsel %vm46, %v231, 0.0
    %v240 = vrot.slane %v239, 4
    %v241 = vadd.f32 %v239, %v240
    %v242 = vrot.slane %v241, 2
    %v243 = vadd.f32 %v241, %v242
    %v244 = vrot.slane %v243, 1
    %v245 = vadd.f32 %v243, %v244
    %v248 = vsel %vm147, %v245, %v238
    %v252 = vlaneseq
    %v253 = vand.u32 %v252, 127
    %v254 = vadd.s32 %v253, 4294967264
    %v255 = vlaneseq
    %v256 = vshrl.u32 %v255, 7
    %v257 = vsub.s32 %v254, %v256
    %v258 = vrot.slane %v226, %v257
    %v259 = vlaneseq
    %v260 = vshrl.u32 %v259, 7
    %v261 = vsub.s32 %v254, %v260
    %v262 = vrot.slane %v229, %v261
    %v263 = vsel %vm147, %v262, %v258
    %v265 = vsel %vm46, %v248, %v263
    %vm266 = vcmask 326656
    %v267 = vsel %vm266, %v265, 0.0
    %268 = vst [vmem:[#allocation7] sm:$0x3] %v267
    // Predicated region
    $region18: #{tpu_custom_call.1} parent=1 // pred_check
      _
    $region19: #{tpu_custom_call.1} parent=1 // pred_check_branch
      %270 = sbr.rel (0) target = $region21
    $region20: #{tpu_custom_call.1} parent=1 // pred_region
      %s272 = ssub.s32 32, 32
      %273 = vsyncadd [#allocation4], %s272
      %s275 = sshll.u32 [#allocation7], 4
      %s276 = int_to_ptr.vmem [resolvable:$true] %s275
      %278 = dma.vmem_to_hbm [thread:$0]  %s276, 32, %s2, [#allocation4]
    $region21: #{tpu_custom_call.1} parent=1 // pred_fallthru
      _
    // Predicated region
    $region22: #{tpu_custom_call.1} parent=1 // pred_check
      _
    $region23: #{tpu_custom_call.1} parent=1 // pred_check_branch
      %280 = sbr.rel (0) target = $region25
    $region24: #{tpu_custom_call.1} parent=1 // pred_region
      %281 = dma.done [#allocation4], 32
    $region25: #{tpu_custom_call.1} parent=1 // pred_fallthru
      _
    %282 = vsyncpa [#allocation3], 1
    %283 = vsyncpa [#allocation6], 1
    %284 = vsyncpa [#allocation4], 1

</llo_original>
